<compile_context>
chip_gen: v7x
topology: tpu7x:2x2x1
jax: 0.10.0
libtpu: 0.0.40
codegen_flags: <defaults>
</compile_context>

<pallas_src>
import jax
import jax.numpy as jnp
from jax.experimental import pallas as pl
from jax.experimental.pallas import tpu as pltpu

BN_EPS = 1e-5
LANE = 128


def _round_up(n, m):
    return ((n + m - 1) // m) * m


# ---------------------------------------------------------------------------
# Fused kernel (whole MLP in one pallas_call)
# ---------------------------------------------------------------------------
def _make_fused_kernel(num_hidden, out_pads):
    """Kernel signature:
         (x, w_0, ..., w_{H}, param_blob, o_ref)
       w_l   : [in_pad_l, out_pad_l]   (pre-transposed Linear weight)
       blob  : [2*H + 1, P]  rows = gamma_0, beta_0, ..., gamma_{H-1},
                                    beta_{H-1}, bias_out  (lane-padded to P)
    """

    def kernel(*refs):
        x_ref = refs[0]
        w_refs = refs[1:1 + num_hidden + 1]
        blob_ref = refs[1 + num_hidden + 1]
        o_ref = refs[-1]

        blob = blob_ref[...]                       # tiny [2H+1, P], load once
        h = x_ref[...]                             # [B, in]

        for l in range(num_hidden):
            op = out_pads[l]
            # Hidden Linear bias intentionally omitted: BN's mean-subtraction
            # cancels it exactly in training mode.
            z = jnp.dot(h, w_refs[l][...], preferred_element_type=jnp.float32)
            mean = jnp.mean(z, axis=0, keepdims=True)          # [1, op]
            c = z - mean
            var = jnp.mean(c * c, axis=0, keepdims=True)       # biased (PyTorch train)
            gamma = blob[2 * l:2 * l + 1, :op]                 # [1, op]
            beta = blob[2 * l + 1:2 * l + 2, :op]              # [1, op]
            scale = gamma * jax.lax.rsqrt(var + BN_EPS)        # fold gamma (1-row mul)
            h = jnp.maximum(c * scale + beta, 0.0)             # ReLU

        op = out_pads[num_hidden]
        b_out = blob[2 * num_hidden:2 * num_hidden + 1, :op]
        z = jnp.dot(h, w_refs[num_hidden][...],
                    preferred_element_type=jnp.float32) + b_out
        o_ref[...] = jax.nn.sigmoid(z)

    return kernel


# ---------------------------------------------------------------------------
# Parameters: PyTorch-default init.  Kept raw (reference / PyTorch layout) and
# kernel-ready (pre-transposed, lane-padded weights + packed 1-row param blob).
# ---------------------------------------------------------------------------
def init_net_params(key, input_features, layers):
    raw = []
    weights_padded = []
    out_pads = []

    in_f = input_features
    prev_pad = input_features        # activation width as the kernel sees it
    n_layers = len(layers)

    hidden_gb = []                   # (gamma, beta, out_f, out_pad) per hidden layer
    out_bias = None

    for li, out_f in enumerate(layers):
        is_output = (li == n_layers - 1)
        key, kw, kb = jax.random.split(key, 3)
        bound = 1.0 / (in_f ** 0.5)
        w = jax.random.uniform(kw, (out_f, in_f), jnp.float32, -bound, bound)
        b = jax.random.uniform(kb, (out_f,), jnp.float32, -bound, bound)

        out_pad = _round_up(out_f, LANE)
        out_pads.append(out_pad)
        wt_p = jnp.zeros((prev_pad, out_pad), jnp.float32).at[:in_f, :out_f].set(w.T)
        weights_padded.append(wt_p)

        if is_output:
            raw.append(("output", w, b))
            out_bias = (b, out_f)
        else:
            gamma = jnp.ones((out_f,), jnp.float32)
            beta = jnp.zeros((out_f,), jnp.float32)
            raw.append(("hidden", w, b, gamma, beta))
            hidden_gb.append((gamma, beta, out_f))

        in_f = out_f
        prev_pad = out_pad

    # Pack all 1-row params into one blob: [2*H + 1, P].
    num_hidden = n_layers - 1
    P = max(out_pads)
    blob = jnp.zeros((2 * num_hidden + 1, P), jnp.float32)
    for l, (gamma, beta, of) in enumerate(hidden_gb):
        blob = blob.at[2 * l, :of].set(gamma)
        blob = blob.at[2 * l + 1, :of].set(beta)
    b_out, of_out = out_bias
    blob = blob.at[2 * num_hidden, :of_out].set(b_out)

    return {
        "raw": raw,
        "weights_padded": weights_padded,
        "param_blob": blob,
        "out_pads": out_pads,
        "num_hidden": num_hidden,
        "out_features": layers[-1],
    }


# ---------------------------------------------------------------------------
# Forward: single fused pallas_call, whole arrays resident in VMEM.
# ---------------------------------------------------------------------------
def net_forward(params, x):
    B = x.shape[0]
    num_hidden = params["num_hidden"]
    out_pads = params["out_pads"]

    flat_inputs = [x] + list(params["weights_padded"]) + [params["param_blob"]]

    vmem = pl.BlockSpec(memory_space=pltpu.MemorySpace.VMEM)
    out_pad = out_pads[-1]

    y_pad = pl.pallas_call(
        _make_fused_kernel(num_hidden, out_pads),
        out_shape=jax.ShapeDtypeStruct((B, out_pad), jnp.float32),
        in_specs=[vmem] * len(flat_inputs),
        out_specs=vmem,
    )(*flat_inputs)

    return y_pad[:, : params["out_features"]]


# ---------------------------------------------------------------------------
# Pure-JAX reference (raw PyTorch-layout params, WITH hidden biases).
# ---------------------------------------------------------------------------
def net_forward_ref(params, x):
    h = x
    for p in params["raw"]:
        if p[0] == "hidden":
            _, w, b, gamma, beta = p
            z = h @ w.T + b
            mean = jnp.mean(z, axis=0, keepdims=True)
            var = jnp.mean((z - mean) ** 2, axis=0, keepdims=True)
            h = jnp.maximum(gamma * (z - mean) / jnp.sqrt(var + BN_EPS) + beta, 0.0)
        else:
            _, w, b = p
            h = jax.nn.sigmoid(h @ w.T + b)
    return h


# TODO(synk): Net.evaluate() (DataLoader accuracy/loss loop) is host-side
# utility code, not part of the forward pass, and is intentionally not ported.

if __name__ == "__main__":
    key = jax.random.PRNGKey(0)
    key, kx = jax.random.split(key)

    batch = 8
    input_features = 16
    layers = [32, 32, 1]    # two hidden blocks + sigmoid output (binary classifier)

    x = jax.random.normal(kx, (batch, input_features), jnp.float32)
    params = init_net_params(key, input_features, layers)

    out = net_forward(params, x)
    out = jax.block_until_ready(out)

    ref = net_forward_ref(params, x)
    assert out.shape == (batch, layers[-1])
    assert jnp.allclose(out, ref, atol=1e-5, rtol=1e-5), "mismatch vs reference"

    print("KERNEL_OK")
</pallas_src>

<mosaic_0001>
module attributes {stable_mosaic.version = 11 : i64} {
  func.func @kernel(%arg0: memref<8x16xf32, #tpu.memory_space<vmem>>, %arg1: memref<16x128xf32, #tpu.memory_space<vmem>>, %arg2: memref<128x128xf32, #tpu.memory_space<vmem>>, %arg3: memref<128x128xf32, #tpu.memory_space<vmem>>, %arg4: memref<5x128xf32, #tpu.memory_space<vmem>>, %arg5: memref<8x128xf32, #tpu.memory_space<vmem>>) attributes {dimension_semantics = [], scalar_prefetch = 0 : i64, scratch_operands = 0 : i64, tpu.core_type = #tpu.core_type<tc>} {
    %c0 = arith.constant 0 : index
    %c0_0 = arith.constant 0 : index
    %0 = vector.load %arg4[%c0, %c0_0] : memref<5x128xf32, #tpu.memory_space<vmem>>, vector<5x128xf32>
    %c0_1 = arith.constant 0 : index
    %c0_2 = arith.constant 0 : index
    %1 = vector.load %arg0[%c0_1, %c0_2] : memref<8x16xf32, #tpu.memory_space<vmem>>, vector<8x16xf32>
    %c0_3 = arith.constant 0 : index
    %c0_4 = arith.constant 0 : index
    %2 = vector.load %arg1[%c0_3, %c0_4] : memref<16x128xf32, #tpu.memory_space<vmem>>, vector<16x128xf32>
    %cst = arith.constant dense<0.000000e+00> : vector<8x128xf32>
    %3 = tpu.matmul %1, %2, %cst {dimension_numbers = #tpu.dot_dimension_numbers<[1], [0], [0], [1], [0, 0, 1, 1], [], []>} : vector<8x16xf32>, vector<16x128xf32>, vector<8x128xf32> -> vector<8x128xf32>
    %cst_5 = arith.constant dense<0.000000e+00> : vector<128xf32>
    %4 = vector.multi_reduction <add>, %3, %cst_5 [0] : vector<8x128xf32> to vector<128xf32>
    %5 = vector.shape_cast %4 : vector<128xf32> to vector<1x128xf32>
    %cst_6 = arith.constant 8.000000e+00 : f32
    %6 = vector.broadcast %cst_6 : f32 to vector<1x128xf32>
    %7 = arith.divf %5, %6 : vector<1x128xf32>
    %8 = vector.broadcast %7 : vector<1x128xf32> to vector<8x128xf32>
    %9 = arith.subf %3, %8 : vector<8x128xf32>
    %10 = arith.mulf %9, %9 : vector<8x128xf32>
    %cst_7 = arith.constant dense<0.000000e+00> : vector<128xf32>
    %11 = vector.multi_reduction <add>, %10, %cst_7 [0] : vector<8x128xf32> to vector<128xf32>
    %12 = vector.shape_cast %11 : vector<128xf32> to vector<1x128xf32>
    %cst_8 = arith.constant 8.000000e+00 : f32
    %13 = vector.broadcast %cst_8 : f32 to vector<1x128xf32>
    %14 = arith.divf %12, %13 : vector<1x128xf32>
    %15 = vector.extract_strided_slice %0 {offsets = [0, 0], sizes = [1, 128], strides = [1, 1]} : vector<5x128xf32> to vector<1x128xf32>
    %16 = vector.extract_strided_slice %0 {offsets = [1, 0], sizes = [1, 128], strides = [1, 1]} : vector<5x128xf32> to vector<1x128xf32>
    %cst_9 = arith.constant 9.99999974E-6 : f32
    %17 = vector.broadcast %cst_9 : f32 to vector<1x128xf32>
    %18 = arith.addf %14, %17 : vector<1x128xf32>
    %19 = math.rsqrt %18 : vector<1x128xf32>
    %20 = arith.mulf %15, %19 : vector<1x128xf32>
    %21 = vector.broadcast %20 : vector<1x128xf32> to vector<8x128xf32>
    %22 = arith.mulf %9, %21 : vector<8x128xf32>
    %23 = vector.broadcast %16 : vector<1x128xf32> to vector<8x128xf32>
    %24 = arith.addf %22, %23 : vector<8x128xf32>
    %cst_10 = arith.constant 0.000000e+00 : f32
    %25 = vector.broadcast %cst_10 : f32 to vector<8x128xf32>
    %26 = arith.maximumf %24, %25 : vector<8x128xf32>
    %c0_11 = arith.constant 0 : index
    %c0_12 = arith.constant 0 : index
    %27 = vector.load %arg2[%c0_11, %c0_12] : memref<128x128xf32, #tpu.memory_space<vmem>>, vector<128x128xf32>
    %cst_13 = arith.constant dense<0.000000e+00> : vector<8x128xf32>
    %28 = tpu.matmul %26, %27, %cst_13 {dimension_numbers = #tpu.dot_dimension_numbers<[1], [0], [0], [1], [0, 0, 1, 1], [], []>} : vector<8x128xf32>, vector<128x128xf32>, vector<8x128xf32> -> vector<8x128xf32>
    %cst_14 = arith.constant dense<0.000000e+00> : vector<128xf32>
    %29 = vector.multi_reduction <add>, %28, %cst_14 [0] : vector<8x128xf32> to vector<128xf32>
    %30 = vector.shape_cast %29 : vector<128xf32> to vector<1x128xf32>
    %cst_15 = arith.constant 8.000000e+00 : f32
    %31 = vector.broadcast %cst_15 : f32 to vector<1x128xf32>
    %32 = arith.divf %30, %31 : vector<1x128xf32>
    %33 = vector.broadcast %32 : vector<1x128xf32> to vector<8x128xf32>
    %34 = arith.subf %28, %33 : vector<8x128xf32>
    %35 = arith.mulf %34, %34 : vector<8x128xf32>
    %cst_16 = arith.constant dense<0.000000e+00> : vector<128xf32>
    %36 = vector.multi_reduction <add>, %35, %cst_16 [0] : vector<8x128xf32> to vector<128xf32>
    %37 = vector.shape_cast %36 : vector<128xf32> to vector<1x128xf32>
    %cst_17 = arith.constant 8.000000e+00 : f32
    %38 = vector.broadcast %cst_17 : f32 to vector<1x128xf32>
    %39 = arith.divf %37, %38 : vector<1x128xf32>
    %40 = vector.extract_strided_slice %0 {offsets = [2, 0], sizes = [1, 128], strides = [1, 1]} : vector<5x128xf32> to vector<1x128xf32>
    %41 = vector.extract_strided_slice %0 {offsets = [3, 0], sizes = [1, 128], strides = [1, 1]} : vector<5x128xf32> to vector<1x128xf32>
    %cst_18 = arith.constant 9.99999974E-6 : f32
    %42 = vector.broadcast %cst_18 : f32 to vector<1x128xf32>
    %43 = arith.addf %39, %42 : vector<1x128xf32>
    %44 = math.rsqrt %43 : vector<1x128xf32>
    %45 = arith.mulf %40, %44 : vector<1x128xf32>
    %46 = vector.broadcast %45 : vector<1x128xf32> to vector<8x128xf32>
    %47 = arith.mulf %34, %46 : vector<8x128xf32>
    %48 = vector.broadcast %41 : vector<1x128xf32> to vector<8x128xf32>
    %49 = arith.addf %47, %48 : vector<8x128xf32>
    %cst_19 = arith.constant 0.000000e+00 : f32
    %50 = vector.broadcast %cst_19 : f32 to vector<8x128xf32>
    %51 = arith.maximumf %49, %50 : vector<8x128xf32>
    %52 = vector.extract_strided_slice %0 {offsets = [4, 0], sizes = [1, 128], strides = [1, 1]} : vector<5x128xf32> to vector<1x128xf32>
    %c0_20 = arith.constant 0 : index
    %c0_21 = arith.constant 0 : index
    %53 = vector.load %arg3[%c0_20, %c0_21] : memref<128x128xf32, #tpu.memory_space<vmem>>, vector<128x128xf32>
    %cst_22 = arith.constant dense<0.000000e+00> : vector<8x128xf32>
    %54 = tpu.matmul %51, %53, %cst_22 {dimension_numbers = #tpu.dot_dimension_numbers<[1], [0], [0], [1], [0, 0, 1, 1], [], []>} : vector<8x128xf32>, vector<128x128xf32>, vector<8x128xf32> -> vector<8x128xf32>
    %55 = vector.broadcast %52 : vector<1x128xf32> to vector<8x128xf32>
    %56 = arith.addf %54, %55 : vector<8x128xf32>
    %57 = arith.negf %56 : vector<8x128xf32>
    %58 = math.exp %57 : vector<8x128xf32>
    %cst_23 = arith.constant 1.000000e+00 : f32
    %59 = vector.broadcast %cst_23 : f32 to vector<8x128xf32>
    %60 = arith.addf %59, %58 : vector<8x128xf32>
    %61 = arith.divf %59, %60 : vector<8x128xf32>
    %c0_24 = arith.constant 0 : index
    %c0_25 = arith.constant 0 : index
    %62 = vector.load %arg5[%c0_24, %c0_25] : memref<8x128xf32, #tpu.memory_space<vmem>>, vector<8x128xf32>
    tpu.vector_store %arg5[%c0_24, %c0_25], %61 {strides = array<i32>} : memref<8x128xf32, #tpu.memory_space<vmem>>, vector<8x128xf32>,
    return
  }
}

</mosaic_0001>

<llo_original>
// kernel: tpu_custom_call.1
$region0: #{tpu_custom_call.1}
  #allocation0 [shape = 'u32[]', space=smem, size = 0x4, offset = 0x4, fixed_abs, tag = 'smem constant byte address 0x4 - core index']
  #allocation1 [shape = 'u32[144,128]{1,0:T(1,128)}', space=vmem, size = 0x12000, scoped, tag = 'internal scratch']
  %s0 = inlined_call_operand.hbm [shape: f32[8,16], index: 0, kind: input, shape index: {}]
  %s1 = inlined_call_operand.hbm [shape: f32[16,128], index: 1, kind: input, shape index: {}]
  %s2 = inlined_call_operand.hbm [shape: f32[128,128], index: 2, kind: input, shape index: {}]
  %s3 = inlined_call_operand.hbm [shape: f32[128,128], index: 3, kind: input, shape index: {}]
  %s4 = inlined_call_operand.vmem [shape: f32[5,128], index: 4, kind: input, shape index: {}]
  %s5 = inlined_call_operand.hbm [shape: f32[8,128], index: 5, kind: output, shape index: {}]
  %s6 = sld [smem:[#allocation0]]
  $region46: #{tpu_custom_call.1} parent=0
    _
  %s8 = ssub.s32 1, %s6
  %s9 = scalar_select 0, %s8, %s6
  $region1: #{tpu_custom_call.1} parent=0
    #allocation2 [shape = 'u8[4096]{0}', space=vmem, size = 0x1000, scoped, tag = 'input window, operand 0, single buffered']
    #allocation3 [shape = 's32[1]{0}', space=sflag, size = 0x4, scoped, tag = 'scoped memory for tpu_custom_call.1']
    #allocation4 [shape = 's32[1]{0}', space=sflag, size = 0x4, scoped, tag = 'scoped memory for tpu_custom_call.1']
    #allocation5 [shape = 'u8[8192]{0}', space=vmem, size = 0x2000, scoped, tag = 'input window, operand 1, single buffered']
    #allocation6 [shape = 's32[1]{0}', space=sflag, size = 0x4, scoped, tag = 'scoped memory for tpu_custom_call.1']
    #allocation7 [shape = 'u8[65536]{0}', space=vmem, size = 0x10000, scoped, tag = 'input window, operand 2, single buffered']
    #allocation8 [shape = 'u8[65536]{0}', space=vmem, size = 0x10000, scoped, tag = 'input window, operand 3, single buffered']
    #allocation9 [shape = 's32[1]{0}', space=sflag, size = 0x4, scoped, tag = 'scoped memory for tpu_custom_call.1']
    #allocation10 [shape = 'u8[4096]{0}', space=vmem, size = 0x1000, scoped, tag = 'output window, operand 0, single buffered']
    %10 = vsyncpa [#allocation3], 0
    %11 = vsyncpa [#allocation6], 0
    %12 = vsyncpa [#allocation9], 0
    %13 = vsyncpa [#allocation4], 0
    // Predicated region
    $region2: #{tpu_custom_call.1} parent=1 // pred_check
      _
    $region3: #{tpu_custom_call.1} parent=1 // pred_check_branch
      %15 = sbr.rel (0) target = $region5
    $region4: #{tpu_custom_call.1} parent=1 // pred_region
      %s17 = ssub.s32 128, 128
      %18 = vsyncadd [#allocation3], %s17
      %s20 = sshll.u32 [#allocation2], 4
      %s21 = int_to_ptr.vmem [resolvable:$true] %s20
      %23 = dma.hbm_to_vmem [thread:$0]  %s0, 128, %s21, [#allocation3]
    $region5: #{tpu_custom_call.1} parent=1 // pred_fallthru
      _
    // Predicated region
    $region6: #{tpu_custom_call.1} parent=1 // pred_check
      _
    $region7: #{tpu_custom_call.1} parent=1 // pred_check_branch
      %25 = sbr.rel (0) target = $region9
    $region8: #{tpu_custom_call.1} parent=1 // pred_region
      %s27 = ssub.s32 256, 256
      %28 = vsyncadd [#allocation6], %s27
      %s29 = sshll.u32 [#allocation5], 4
      %s30 = int_to_ptr.vmem [resolvable:$true] %s29
      %35 = dma.hbm_to_vmem [thread:$0]  %s1, 256, %s30, [#allocation6], 128, 128, 8
    $region9: #{tpu_custom_call.1} parent=1 // pred_fallthru
      _
    // Predicated region
    $region10: #{tpu_custom_call.1} parent=1 // pred_check
      _
    $region11: #{tpu_custom_call.1} parent=1 // pred_check_branch
      %37 = sbr.rel (0) target = $region13
    $region12: #{tpu_custom_call.1} parent=1 // pred_region
      %s39 = ssub.s32 2048, 2048
      %40 = vsyncadd [#allocation6], %s39
      %s41 = sshll.u32 [#allocation7], 4
      %s42 = int_to_ptr.vmem [resolvable:$true] %s41
      %47 = dma.hbm_to_vmem [thread:$0]  %s2, 2048, %s42, [#allocation6], 128, 128, 8
    $region13: #{tpu_custom_call.1} parent=1 // pred_fallthru
      _
    // Predicated region
    $region14: #{tpu_custom_call.1} parent=1 // pred_check
      _
    $region15: #{tpu_custom_call.1} parent=1 // pred_check_branch
      %49 = sbr.rel (0) target = $region17
    $region16: #{tpu_custom_call.1} parent=1 // pred_region
      %s51 = ssub.s32 2048, 2048
      %52 = vsyncadd [#allocation9], %s51
      %s53 = sshll.u32 [#allocation8], 4
      %s54 = int_to_ptr.vmem [resolvable:$true] %s53
      %59 = dma.hbm_to_vmem [thread:$0]  %s3, 2048, %s54, [#allocation9], 128, 128, 8
    $region17: #{tpu_custom_call.1} parent=1 // pred_fallthru
      _
    // Predicated region
    $region18: #{tpu_custom_call.1} parent=1 // pred_check
      _
    $region19: #{tpu_custom_call.1} parent=1 // pred_check_branch
      %61 = sbr.rel (0) target = $region21
    $region20: #{tpu_custom_call.1} parent=1 // pred_region
      _
    $region21: #{tpu_custom_call.1} parent=1 // pred_fallthru
      _
    // Predicated region
    $region22: #{tpu_custom_call.1} parent=1 // pred_check
      _
    $region23: #{tpu_custom_call.1} parent=1 // pred_check_branch
      %63 = sbr.rel (0) target = $region25
    $region24: #{tpu_custom_call.1} parent=1 // pred_region
      %64 = dma.done [#allocation3], 128
    $region25: #{tpu_custom_call.1} parent=1 // pred_fallthru
      _
    // Predicated region
    $region26: #{tpu_custom_call.1} parent=1 // pred_check
      _
    $region27: #{tpu_custom_call.1} parent=1 // pred_check_branch
      %66 = sbr.rel (0) target = $region29
    $region28: #{tpu_custom_call.1} parent=1 // pred_region
      %67 = dma.done [#allocation6], 256
    $region29: #{tpu_custom_call.1} parent=1 // pred_fallthru
      _
    // Predicated region
    $region30: #{tpu_custom_call.1} parent=1 // pred_check
      _
    $region31: #{tpu_custom_call.1} parent=1 // pred_check_branch
      %69 = sbr.rel (0) target = $region33
    $region32: #{tpu_custom_call.1} parent=1 // pred_region
      %70 = dma.done [#allocation6], 2048
    $region33: #{tpu_custom_call.1} parent=1 // pred_fallthru
      _
    // Predicated region
    $region34: #{tpu_custom_call.1} parent=1 // pred_check
      _
    $region35: #{tpu_custom_call.1} parent=1 // pred_check_branch
      %72 = sbr.rel (0) target = $region37
    $region36: #{tpu_custom_call.1} parent=1 // pred_region
      %73 = dma.done [#allocation9], 2048
    $region37: #{tpu_custom_call.1} parent=1 // pred_fallthru
      _
    %v74 = vld [vmem:[%s4] sm:$0x1f]
    %v75 = vld [vmem:[#allocation2] sm:$0xff]
    %v76 = vld [vmem:[#allocation5] sm:$0xff]
    %v77 = vld [vmem:[#allocation5 + $0x8] sm:$0xff]
    %vm78 = vcmask 130048
    %v80 = vsel %vm78, %v75, 0
    %82 = vmatprep.subr.mxu0 0.0
    %83 = vmatpush1.msra.mxu0 %v76
    %84 = vmatprep.subr.mxu0 0.0
    %85 = vmatpush1.msra.mxu0 %v77
    %86 = vmatprep.subr.mxu0 0.0
    %87 = vmatpush1.msra.mxu0 0.0
    %88 = vmatprep.subr.mxu0 0.0
    %89 = vmatpush1.msra.mxu0 0.0
    %90 = vmatprep.subr.mxu0 0.0
    %91 = vmatpush1.msra.mxu0 0.0
    %92 = vmatprep.subr.mxu0 0.0
    %93 = vmatpush1.msra.mxu0 0.0
    %94 = vmatprep.subr.mxu0 0.0
    %95 = vmatpush1.msra.mxu0 0.0
    %96 = vmatprep.subr.mxu0 0.0
    %97 = vmatpush1.msra.mxu0 0.0
    %98 = vmatprep.subr.mxu0 0.0
    %99 = vmatpush1.msra.mxu0 0.0
    %100 = vmatprep.subr.mxu0 0.0
    %101 = vmatpush1.msra.mxu0 0.0
    %102 = vmatprep.subr.mxu0 0.0
    %103 = vmatpush1.msra.mxu0 0.0
    %104 = vmatprep.subr.mxu0 0.0
    %105 = vmatpush1.msra.mxu0 0.0
    %106 = vmatprep.subr.mxu0 0.0
    %107 = vmatpush1.msra.mxu0 0.0
    %108 = vmatprep.subr.mxu0 0.0
    %109 = vmatpush1.msra.mxu0 0.0
    %110 = vmatprep.subr.mxu0 0.0
    %111 = vmatpush1.msra.mxu0 0.0
    %112 = vmatprep.subr.mxu0 0.0
    %113 = vmatpush1.msra.mxu0 0.0
    %114 = vmatprep.subr.mxu0 0.0
    %115 = vmatpush1.msra.mxu0 0.0
    %116 = vmatprep.subr.mxu0 0.0
    %117 = vmatpush1.msra.mxu0 0.0
    %118 = vmatprep.subr.mxu0 0.0
    %119 = vmatpush1.msra.mxu0 0.0
    %120 = vmatprep.subr.mxu0 0.0
    %121 = vmatpush1.msra.mxu0 0.0
    %122 = vmatprep.subr.mxu0 0.0
    %123 = vmatpush1.msra.mxu0 0.0
    %124 = vmatprep.subr.mxu0 0.0
    %125 = vmatpush1.msra.mxu0 0.0
    %126 = vmatprep.subr.mxu0 0.0
    %127 = vmatpush1.msra.mxu0 0.0
    %128 = vmatprep.subr.mxu0 0.0
    %129 = vmatpush1.msra.mxu0 0.0
    %130 = vmatprep.subr.mxu0 0.0
    %131 = vmatpush1.msra.mxu0 0.0
    %132 = vmatprep.subr.mxu0 0.0
    %133 = vmatpush1.msra.mxu0 0.0
    %134 = vmatprep.subr.mxu0 0.0
    %135 = vmatpush1.msra.mxu0 0.0
    %136 = vmatprep.subr.mxu0 0.0
    %137 = vmatpush1.msra.mxu0 0.0
    %138 = vmatprep.subr.mxu0 0.0
    %139 = vmatpush1.msra.mxu0 0.0
    %140 = vmatprep.subr.mxu0 0.0
    %141 = vmatpush1.msra.mxu0 0.0
    %142 = vmatprep.subr.mxu0 0.0
    %143 = vmatpush1.msra.mxu0 0.0
    %144 = vmatprep.subr.mxu0 0.0
    %145 = vmatpush1.msra.mxu0 0.0
    %146 = vmatprep.mubr.f32.mxu0 0.0
    %147 = vmatmul.mubr.f32.gmra.mrb[0].mxu0 %v80
    %v148 = vpop.f32.mrb[0].mxu0
    %v149 = vadd.f32 0.0, %v148
    %v150 = vpop.f32.mrb[0].mxu0
    %151 = vdwg.mxu0
    %v152 = vrot.slane %v149, 4
    %v153 = vadd.f32 %v149, %v152
    %v154 = vrot.slane %v153, 2
    %v155 = vadd.f32 %v153, %v154
    %v156 = vrot.slane %v155, 1
    %v157 = vadd.f32 %v155, %v156
    %v158 = vrcp.pop 8.0
    %v159 = vmul.f32 %v157, %v158
    %v160 = vsub.f32 %v149, %v159
    %v161 = vmul.f32 %v160, %v160
    %v162 = vrot.slane %v161, 4
    %v163 = vadd.f32 %v161, %v162
    %v164 = vrot.slane %v163, 2
    %v165 = vadd.f32 %v163, %v164
    %v166 = vrot.slane %v165, 1
    %v167 = vadd.f32 %v165, %v166
    %v168 = vmul.f32 %v167, %v158
    %v169 = vadd.f32 %v168, 1e-05
    %v170 = vrsqrt.pop %v169
    %v171 = vmul.f32 %v74, %v170
    %v172 = vlaneseq
    %v173 = vshrl.u32 %v172, 7
    %v174 = vsub.s32 0, %v173
    %v175 = vrot.slane %v171, %v174
    %v176 = vmul.f32 %v160, %v175
    %v177 = vlaneseq
    %v178 = vshrl.u32 %v177, 7
    %v179 = vsub.s32 1, %v178
    %v180 = vrot.slane %v74, %v179
    %v181 = vadd.f32 %v176, %v180
    %v182 = vmax.f32 %v181, 0.0
    %v183 = vld [vmem:[#allocation7] sm:$0xff]
    %v184 = vld [vmem:[#allocation7 + $0x8] sm:$0xff]
    %v185 = vld [vmem:[#allocation7 + $0x10] sm:$0xff]
    %v186 = vld [vmem:[#allocation7 + $0x18] sm:$0xff]
    %v187 = vld [vmem:[#allocation7 + $0x20] sm:$0xff]
    %v188 = vld [vmem:[#allocation7 + $0x28] sm:$0xff]
    %v189 = vld [vmem:[#allocation7 + $0x30] sm:$0xff]
    %v190 = vld [vmem:[#allocation7 + $0x38] sm:$0xff]
    %v191 = vld [vmem:[#allocation7 + $0x40] sm:$0xff]
    %v192 = vld [vmem:[#allocation7 + $0x48] sm:$0xff]
    %v193 = vld [vmem:[#allocation7 + $0x50] sm:$0xff]
    %v194 = vld [vmem:[#allocation7 + $0x58] sm:$0xff]
    %v195 = vld [vmem:[#allocation7 + $0x60] sm:$0xff]
    %v196 = vld [vmem:[#allocation7 + $0x68] sm:$0xff]
    %v197 = vld [vmem:[#allocation7 + $0x70] sm:$0xff]
    %v198 = vld [vmem:[#allocation7 + $0x78] sm:$0xff]
    %199 = vmatprep.subr.mxu0 0.0
    %200 = vmatpush1.msra.mxu0 %v183
    %201 = vmatprep.subr.mxu0 0.0
    %202 = vmatpush1.msra.mxu0 %v184
    %203 = vmatprep.subr.mxu0 0.0
    %204 = vmatpush1.msra.mxu0 %v185
    %205 = vmatprep.subr.mxu0 0.0
    %206 = vmatpush1.msra.mxu0 %v186
    %207 = vmatprep.subr.mxu0 0.0
    %208 = vmatpush1.msra.mxu0 %v187
    %209 = vmatprep.subr.mxu0 0.0
    %210 = vmatpush1.msra.mxu0 %v188
    %211 = vmatprep.subr.mxu0 0.0
    %212 = vmatpush1.msra.mxu0 %v189
    %213 = vmatprep.subr.mxu0 0.0
    %214 = vmatpush1.msra.mxu0 %v190
    %215 = vmatprep.subr.mxu0 0.0
    %216 = vmatpush1.msra.mxu0 %v191
    %217 = vmatprep.subr.mxu0 0.0
    %218 = vmatpush1.msra.mxu0 %v192
    %219 = vmatprep.subr.mxu0 0.0
    %220 = vmatpush1.msra.mxu0 %v193
    %221 = vmatprep.subr.mxu0 0.0
    %222 = vmatpush1.msra.mxu0 %v194
    %223 = vmatprep.subr.mxu0 0.0
    %224 = vmatpush1.msra.mxu0 %v195
    %225 = vmatprep.subr.mxu0 0.0
    %226 = vmatpush1.msra.mxu0 %v196
    %227 = vmatprep.subr.mxu0 0.0
    %228 = vmatpush1.msra.mxu0 %v197
    %229 = vmatprep.subr.mxu0 0.0
    %230 = vmatpush1.msra.mxu0 %v198
    %231 = vmatprep.subr.mxu0 0.0
    %232 = vmatpush1.msra.mxu0 0.0
    %233 = vmatprep.subr.mxu0 0.0
    %234 = vmatpush1.msra.mxu0 0.0
    %235 = vmatprep.subr.mxu0 0.0
    %236 = vmatpush1.msra.mxu0 0.0
    %237 = vmatprep.subr.mxu0 0.0
    %238 = vmatpush1.msra.mxu0 0.0
    %239 = vmatprep.subr.mxu0 0.0
    %240 = vmatpush1.msra.mxu0 0.0
    %241 = vmatprep.subr.mxu0 0.0
    %242 = vmatpush1.msra.mxu0 0.0
    %243 = vmatprep.subr.mxu0 0.0
    %244 = vmatpush1.msra.mxu0 0.0
    %245 = vmatprep.subr.mxu0 0.0
    %246 = vmatpush1.msra.mxu0 0.0
    %247 = vmatprep.subr.mxu0 0.0
    %248 = vmatpush1.msra.mxu0 0.0
    %249 = vmatprep.subr.mxu0 0.0
    %250 = vmatpush1.msra.mxu0 0.0
    %251 = vmatprep.subr.mxu0 0.0
    %252 = vmatpush1.msra.mxu0 0.0
    %253 = vmatprep.subr.mxu0 0.0
    %254 = vmatpush1.msra.mxu0 0.0
    %255 = vmatprep.subr.mxu0 0.0
    %256 = vmatpush1.msra.mxu0 0.0
    %257 = vmatprep.subr.mxu0 0.0
    %258 = vmatpush1.msra.mxu0 0.0
    %259 = vmatprep.subr.mxu0 0.0
    %260 = vmatpush1.msra.mxu0 0.0
    %261 = vmatprep.subr.mxu0 0.0
    %262 = vmatpush1.msra.mxu0 0.0
    %263 = vmatprep.mubr.f32.mxu0 0.0
    %264 = vmatmul.mubr.f32.gmra.mrb[0].mxu0 %v182
    %v265 = vpop.f32.mrb[0].mxu0
    %v266 = vadd.f32 0.0, %v265
    %v267 = vpop.f32.mrb[0].mxu0
    %268 = vdwg.mxu0
    %v269 = vrot.slane %v266, 4
    %v270 = vadd.f32 %v266, %v269
    %v271 = vrot.slane %v270, 2
    %v272 = vadd.f32 %v270, %v271
    %v273 = vrot.slane %v272, 1
    %v274 = vadd.f32 %v272, %v273
    %v275 = vmul.f32 %v274, %v158
    %v276 = vsub.f32 %v266, %v275
    %v277 = vmul.f32 %v276, %v276
    %v278 = vrot.slane %v277, 4
    %v279 = vadd.f32 %v277, %v278
    %v280 = vrot.slane %v279, 2
    %v281 = vadd.f32 %v279, %v280
    %v282 = vrot.slane %v281, 1
    %v283 = vadd.f32 %v281, %v282
    %v284 = vmul.f32 %v283, %v158
    %v285 = vadd.f32 %v284, 1e-05
    %v286 = vrsqrt.pop %v285
    %v287 = vmul.f32 %v74, %v286
    %v288 = vlaneseq
    %v289 = vshrl.u32 %v288, 7
    %v290 = vsub.s32 2, %v289
    %v291 = vrot.slane %v287, %v290
    %v292 = vmul.f32 %v276, %v291
    %v293 = vlaneseq
    %v294 = vshrl.u32 %v293, 7
    %v295 = vsub.s32 3, %v294
    %v296 = vrot.slane %v74, %v295
    %v297 = vadd.f32 %v292, %v296
    %v298 = vmax.f32 %v297, 0.0
    %v299 = vld [vmem:[#allocation8] sm:$0xff]
    %v300 = vld [vmem:[#allocation8 + $0x8] sm:$0xff]
    %v301 = vld [vmem:[#allocation8 + $0x10] sm:$0xff]
    %v302 = vld [vmem:[#allocation8 + $0x18] sm:$0xff]
    %v303 = vld [vmem:[#allocation8 + $0x20] sm:$0xff]
    %v304 = vld [vmem:[#allocation8 + $0x28] sm:$0xff]
    %v305 = vld [vmem:[#allocation8 + $0x30] sm:$0xff]
    %v306 = vld [vmem:[#allocation8 + $0x38] sm:$0xff]
    %v307 = vld [vmem:[#allocation8 + $0x40] sm:$0xff]
    %v308 = vld [vmem:[#allocation8 + $0x48] sm:$0xff]
    %v309 = vld [vmem:[#allocation8 + $0x50] sm:$0xff]
    %v310 = vld [vmem:[#allocation8 + $0x58] sm:$0xff]
    %v311 = vld [vmem:[#allocation8 + $0x60] sm:$0xff]
    %v312 = vld [vmem:[#allocation8 + $0x68] sm:$0xff]
    %v313 = vld [vmem:[#allocation8 + $0x70] sm:$0xff]
    %v314 = vld [vmem:[#allocation8 + $0x78] sm:$0xff]
    %v315 = vlaneseq
    %v316 = vshrl.u32 %v315, 7
    %v317 = vsub.s32 4, %v316
    %v318 = vrot.slane %v74, %v317
    %319 = vmatprep.subr.mxu0 0.0
    %320 = vmatpush1.msra.mxu0 %v299
    %321 = vmatprep.subr.mxu0 0.0
    %322 = vmatpush1.msra.mxu0 %v300
    %323 = vmatprep.subr.mxu0 0.0
    %324 = vmatpush1.msra.mxu0 %v301
    %325 = vmatprep.subr.mxu0 0.0
    %326 = vmatpush1.msra.mxu0 %v302
    %327 = vmatprep.subr.mxu0 0.0
    %328 = vmatpush1.msra.mxu0 %v303
    %329 = vmatprep.subr.mxu0 0.0
    %330 = vmatpush1.msra.mxu0 %v304
    %331 = vmatprep.subr.mxu0 0.0
    %332 = vmatpush1.msra.mxu0 %v305
    %333 = vmatprep.subr.mxu0 0.0
    %334 = vmatpush1.msra.mxu0 %v306
    %335 = vmatprep.subr.mxu0 0.0
    %336 = vmatpush1.msra.mxu0 %v307
    %337 = vmatprep.subr.mxu0 0.0
    %338 = vmatpush1.msra.mxu0 %v308
    %339 = vmatprep.subr.mxu0 0.0
    %340 = vmatpush1.msra.mxu0 %v309
    %341 = vmatprep.subr.mxu0 0.0
    %342 = vmatpush1.msra.mxu0 %v310
    %343 = vmatprep.subr.mxu0 0.0
    %344 = vmatpush1.msra.mxu0 %v311
    %345 = vmatprep.subr.mxu0 0.0
    %346 = vmatpush1.msra.mxu0 %v312
    %347 = vmatprep.subr.mxu0 0.0
    %348 = vmatpush1.msra.mxu0 %v313
    %349 = vmatprep.subr.mxu0 0.0
    %350 = vmatpush1.msra.mxu0 %v314
    %351 = vmatprep.subr.mxu0 0.0
    %352 = vmatpush1.msra.mxu0 0.0
    %353 = vmatprep.subr.mxu0 0.0
    %354 = vmatpush1.msra.mxu0 0.0
    %355 = vmatprep.subr.mxu0 0.0
    %356 = vmatpush1.msra.mxu0 0.0
    %357 = vmatprep.subr.mxu0 0.0
    %358 = vmatpush1.msra.mxu0 0.0
    %359 = vmatprep.subr.mxu0 0.0
    %360 = vmatpush1.msra.mxu0 0.0
    %361 = vmatprep.subr.mxu0 0.0
    %362 = vmatpush1.msra.mxu0 0.0
    %363 = vmatprep.subr.mxu0 0.0
    %364 = vmatpush1.msra.mxu0 0.0
    %365 = vmatprep.subr.mxu0 0.0
    %366 = vmatpush1.msra.mxu0 0.0
    %367 = vmatprep.subr.mxu0 0.0
    %368 = vmatpush1.msra.mxu0 0.0
    %369 = vmatprep.subr.mxu0 0.0
    %370 = vmatpush1.msra.mxu0 0.0
    %371 = vmatprep.subr.mxu0 0.0
    %372 = vmatpush1.msra.mxu0 0.0
    %373 = vmatprep.subr.mxu0 0.0
    %374 = vmatpush1.msra.mxu0 0.0
    %375 = vmatprep.subr.mxu0 0.0
    %376 = vmatpush1.msra.mxu0 0.0
    %377 = vmatprep.subr.mxu0 0.0
    %378 = vmatpush1.msra.mxu0 0.0
    %379 = vmatprep.subr.mxu0 0.0
    %380 = vmatpush1.msra.mxu0 0.0
    %381 = vmatprep.subr.mxu0 0.0
    %382 = vmatpush1.msra.mxu0 0.0
    %383 = vmatprep.mubr.f32.mxu0 0.0
    %384 = vmatmul.mubr.f32.gmra.mrb[0].mxu0 %v298
    %v385 = vpop.f32.mrb[0].mxu0
    %v386 = vadd.f32 %v318, %v385
    %v387 = vpop.f32.mrb[0].mxu0
    %388 = vdwg.mxu0
    %v389 = vxor.u32 %v386, 2147483648
    %v390 = vmul.f32 %v389, 1.442695
    %v391 = vpow.pop %v390
    %v392 = vadd.f32 %v391, 1.0
    %v393 = vrcp.pop %v392
    %v394 = vmul.f32 1.0, %v393
    %395 = vst [vmem:[#allocation10] sm:$0xff] %v394
    // Predicated region
    $region38: #{tpu_custom_call.1} parent=1 // pred_check
      _
    $region39: #{tpu_custom_call.1} parent=1 // pred_check_branch
      %397 = sbr.rel (0) target = $region41
    $region40: #{tpu_custom_call.1} parent=1 // pred_region
      %s399 = ssub.s32 128, 128
      %400 = vsyncadd [#allocation4], %s399
      %s402 = sshll.u32 [#allocation10], 4
      %s403 = int_to_ptr.vmem [resolvable:$true] %s402
      %405 = dma.vmem_to_hbm [thread:$0]  %s403, 128, %s5, [#allocation4]
    $region41: #{tpu_custom_call.1} parent=1 // pred_fallthru
      _
    // Predicated region
    $region42: #{tpu_custom_call.1} parent=1 // pred_check
      _
    $region43: #{tpu_custom_call.1} parent=1 // pred_check_branch
      %407 = sbr.rel (0) target = $region45
    $region44: #{tpu_custom_call.1} parent=1 // pred_region
      %408 = dma.done [#allocation4], 128
    $region45: #{tpu_custom_call.1} parent=1 // pred_fallthru
      _
    %409 = vsyncpa [#allocation3], 1
    %410 = vsyncpa [#allocation6], 1
    %411 = vsyncpa [#allocation9], 1
    %412 = vsyncpa [#allocation4], 1

</llo_original>
